<compile_context>
chip_gen: v6e
topology: v6e:2x2x1
jax: 0.10.0
libtpu: 0.0.40
codegen_flags: <defaults>
</compile_context>

<pallas_src>
import functools

import jax
import jax.numpy as jnp
from jax.experimental import pallas as pl
from jax.experimental.pallas import tpu as pltpu


# ---------------------------------------------------------------------------
# Generation-aware VMEM budgets.
# ---------------------------------------------------------------------------
def _vmem_budgets():
    """Returns (vmem_capacity, default_tile_budget, vmem_limit_cap) in bytes."""
    cap = None
    try:
        cap = getattr(pltpu.get_tpu_info(), "vmem_capacity_bytes", None)
    except Exception:
        cap = None
    if cap is None:
        cap = 64 << 20                      # conservative: assume v7x-sized VMEM
    if cap >= (128 << 20):                  # v5e / v6e: 128 MiB per core
        return cap, 16 << 20, 96 << 20
    return cap, 7 << 20, 52 << 20           # v7x: 64 MiB per core, leave headroom


def _pick_batch_tile(bs, per_batch_bytes, target_tile_bytes, target_steps=8):
    """Byte-budget batch tile, shrunk so the grid has >= target_steps steps
    (>= 4 per TensorCore on v7x) whenever bs permits."""
    tb_budget = max(1, target_tile_bytes // per_batch_bytes)
    tb_steps = max(1, pl.cdiv(bs, target_steps))
    return int(max(1, min(bs, tb_budget, tb_steps)))


# ---------------------------------------------------------------------------
# Path 1: whole-(s, h) slab per batch tile (the common case).
# ---------------------------------------------------------------------------
def _se_kernel(x_ref, w1_ref, w2_ref, o_ref, *, use_max_pooling):
    # x_ref: (TB, S, H) block covering TB batch elements.
    # --- squeeze: mean / max over the hidden axis, accumulated in f32 without a
    #     full-tile f32 copy of x.
    if use_max_pooling:
        y = jnp.max(x_ref[...], axis=-1).astype(jnp.float32)           # (TB, S)
    else:
        y = jnp.mean(x_ref[...], axis=-1, dtype=jnp.float32)           # (TB, S)

    # --- excitation: Linear -> ReLU -> Linear -> Sigmoid (tiny, hidden under DMA).
    h1 = jnp.maximum(
        jnp.dot(y, w1_ref[...], preferred_element_type=jnp.float32), 0.0)
    y2 = jax.nn.sigmoid(
        jnp.dot(h1, w2_ref[...], preferred_element_type=jnp.float32))  # (TB, S)

    # --- scale in x's native dtype (no f32 tile copy).
    scale = y2.astype(o_ref.dtype)[:, :, None]                         # (TB, S, 1)
    o_ref[...] = x_ref[...] * scale


def _se_layer_1d_simple(x, w1, w2, *, use_max_pooling, target_tile_bytes,
                        vmem_cap_limit, w_bytes, batch_tile):
    bs, s, h = x.shape
    hid = w1.shape[1]
    itemsize = jnp.dtype(x.dtype).itemsize
    per_batch_bytes = s * h * itemsize

    tb = batch_tile if batch_tile is not None else _pick_batch_tile(
        bs, per_batch_bytes, target_tile_bytes)
    tb = int(max(1, min(tb, bs)))
    grid = (pl.cdiv(bs, tb),)               # cdiv: last block may be partial (masked)

    tile_bytes = tb * per_batch_bytes
    vmem_bytes = 4 * tile_bytes + 2 * w_bytes + (2 << 20)
    vmem_limit = int(min(max(vmem_bytes, 32 << 20), vmem_cap_limit))

    kernel = functools.partial(_se_kernel, use_max_pooling=use_max_pooling)

    return pl.pallas_call(
        kernel,
        out_shape=jax.ShapeDtypeStruct((bs, s, h), x.dtype),
        grid_spec=pltpu.PrefetchScalarGridSpec(
            num_scalar_prefetch=0,
            grid=grid,
            in_specs=[
                pl.BlockSpec((tb, s, h), lambda b: (b, 0, 0)),
                pl.BlockSpec((s, hid), lambda b: (0, 0)),    # resident weights
                pl.BlockSpec((hid, s), lambda b: (0, 0)),    # resident weights
            ],
            out_specs=pl.BlockSpec((tb, s, h), lambda b: (b, 0, 0)),
        ),
        compiler_params=pltpu.CompilerParams(
            dimension_semantics=("parallel",),
            vmem_limit_bytes=vmem_limit,
        ),
    )(x, w1, w2)


# ---------------------------------------------------------------------------
# Path 2: hidden-axis streaming fallback for slabs that do not fit VMEM.
# Grid (bs, 2, nh): pass 0 accumulates the squeeze + runs the excitation,
# pass 1 re-streams x and applies the gate. x is read twice from HBM.
# ---------------------------------------------------------------------------
def _se_hstream_kernel(x_ref, w1_ref, w2_ref, o_ref, y_acc, gate,
                       *, use_max_pooling, h_total, h_block):
    p = pl.program_id(1)
    hk = pl.program_id(2)
    nh = pl.num_programs(2)

    @pl.when(jnp.logical_and(p == 0, hk == 0))
    def _():
        if use_max_pooling:
            y_acc[...] = jnp.full_like(y_acc, -jnp.inf)
        else:
            y_acc[...] = jnp.zeros_like(y_acc)

    @pl.when(p == 0)
    def _():
        xb = x_ref[...]                                          # (1, S, TH)
        if h_total % h_block != 0:
            # Mask the padded columns of the final partial h block.
            col = hk * h_block + jax.lax.broadcasted_iota(jnp.int32, xb.shape, 2)
            pad = -jnp.inf if use_max_pooling else 0.0
            xb = jnp.where(col < h_total, xb, jnp.asarray(pad, dtype=xb.dtype))
        if use_max_pooling:
            y_acc[...] = jnp.maximum(
                y_acc[...], jnp.max(xb, axis=-1).astype(jnp.float32))
        else:
            y_acc[...] = y_acc[...] + jnp.sum(xb, axis=-1, dtype=jnp.float32)

    @pl.when(jnp.logical_and(p == 0, hk == nh - 1))
    def _():
        y = y_acc[...]
        if not use_max_pooling:
            y = y * (1.0 / h_total)
        h1 = jnp.maximum(
            jnp.dot(y, w1_ref[...], preferred_element_type=jnp.float32), 0.0)
        gate[...] = jax.nn.sigmoid(
            jnp.dot(h1, w2_ref[...], preferred_element_type=jnp.float32))

    @pl.when(p == 1)
    def _():
        scale = gate[...].astype(o_ref.dtype)[:, :, None]        # (1, S, 1)
        o_ref[...] = x_ref[...] * scale


def _se_layer_1d_hstream(x, w1, w2, *, use_max_pooling, target_tile_bytes,
                         vmem_cap_limit, w_bytes, h_block):
    bs, s, h = x.shape
    hid = w1.shape[1]
    itemsize = jnp.dtype(x.dtype).itemsize

    if h_block is None:
        budget = min(target_tile_bytes,
                     max(1, (vmem_cap_limit - 2 * w_bytes - (2 << 20)) // 4))
        th = max(1, budget // (s * itemsize))
    else:
        th = int(h_block)
    if th < h:
        th = max(128, (th // 128) * 128)     # (8,128) rule: multiple of 128 unless == h
    th = min(th, h)
    nh = pl.cdiv(h, th)

    tile_bytes = s * th * itemsize
    vmem_bytes = 4 * tile_bytes + 2 * w_bytes + 2 * (s * 4) + (2 << 20)
    vmem_limit = int(min(max(vmem_bytes, 32 << 20), vmem_cap_limit))

    kernel = functools.partial(_se_hstream_kernel,
                               use_max_pooling=use_max_pooling,
                               h_total=h, h_block=th)

    return pl.pallas_call(
        kernel,
        out_shape=jax.ShapeDtypeStruct((bs, s, h), x.dtype),
        grid_spec=pltpu.PrefetchScalarGridSpec(
            num_scalar_prefetch=0,
            grid=(bs, 2, nh),
            in_specs=[
                pl.BlockSpec((1, s, th), lambda b, p, k: (b, 0, k)),
                pl.BlockSpec((s, hid), lambda b, p, k: (0, 0)),   # resident weights
                pl.BlockSpec((hid, s), lambda b, p, k: (0, 0)),   # resident weights
            ],
            # p*k: during the reduce pass (p=0) the output block index stays at
            # (b,0,0) and is never written back; every block is written exactly once
            # during the scale pass (p=1).
            out_specs=pl.BlockSpec((1, s, th), lambda b, p, k: (b, 0, p * k)),
            scratch_shapes=[pltpu.VMEM((1, s), jnp.float32),   # y accumulator
                            pltpu.VMEM((1, s), jnp.float32)],  # sigmoid gate
        ),
        compiler_params=pltpu.CompilerParams(
            dimension_semantics=("parallel", "arbitrary", "arbitrary"),
            vmem_limit_bytes=vmem_limit,
        ),
    )(x, w1, w2)


# ---------------------------------------------------------------------------
# Public wrapper.
# ---------------------------------------------------------------------------
def se_layer_1d(x, w1, w2, *, use_max_pooling=False, target_tile_bytes=None,
                batch_tile=None, h_block=None):
    """x: (bs, s, h); w1: (s, s//r); w2: (s//r, s). Returns x * sigmoid(gate)."""
    bs, s, h = x.shape
    hid = w1.shape[1]
    assert w1.shape == (s, hid) and w2.shape == (hid, s)

    itemsize = jnp.dtype(x.dtype).itemsize
    per_batch_bytes = s * h * itemsize
    w_bytes = (w1.size * jnp.dtype(w1.dtype).itemsize
               + w2.size * jnp.dtype(w2.dtype).itemsize)

    _, default_tile_bytes, vmem_cap_limit = _vmem_budgets()
    if target_tile_bytes is None:
        target_tile_bytes = default_tile_bytes

    # If even one double-buffered (1, s, h) slab (in + out) plus resident weights
    # would blow the per-generation VMEM cap, stream the hidden axis instead.
    needs_h_stream = (4 * per_batch_bytes + 2 * w_bytes + (2 << 20)) > vmem_cap_limit
    if h_block is not None or needs_h_stream:
        return _se_layer_1d_hstream(
            x, w1, w2, use_max_pooling=use_max_pooling,
            target_tile_bytes=target_tile_bytes, vmem_cap_limit=vmem_cap_limit,
            w_bytes=w_bytes, h_block=h_block)

    return _se_layer_1d_simple(
        x, w1, w2, use_max_pooling=use_max_pooling,
        target_tile_bytes=target_tile_bytes, vmem_cap_limit=vmem_cap_limit,
        w_bytes=w_bytes, batch_tile=batch_tile)


def se_layer_1d_ref(x, w1, w2, use_max_pooling=False):
    if use_max_pooling:
        y = jnp.max(x, axis=-1)              # (bs, s)
    else:
        y = jnp.mean(x, axis=-1)             # (bs, s)
    h1 = jnp.maximum(y @ w1, 0.0)            # (bs, s//r)
    y2 = jax.nn.sigmoid(h1 @ w2)             # (bs, s)
    return x * y2[:, :, None]


if __name__ == "__main__":
    key = jax.random.PRNGKey(0)
    kx, k1, k2, kx2, kx3 = jax.random.split(key, 5)

    # Small shapes consistent with the module: channel == s (Linears act on seq dim).
    bs, s, h, reduction = 2, 8, 16, 4
    hid = s // reduction

    x = jax.random.normal(kx, (bs, s, h), dtype=jnp.float32)
    # PyTorch stores Linear weights as (out, in); we keep the (in, out) transpose.
    w1 = jax.random.normal(k1, (s, hid), dtype=jnp.float32) * 0.1
    w2 = jax.random.normal(k2, (hid, s), dtype=jnp.float32) * 0.1

    # Default (AdaptiveAvgPool1d) path.
    out = jax.block_until_ready(se_layer_1d(x, w1, w2))
    ref = se_layer_1d_ref(x, w1, w2)
    assert jnp.allclose(out, ref, atol=1e-5, rtol=1e-5), "avg-pool mismatch vs reference"

    # use_max_pooling=True path.
    out_max = jax.block_until_ready(se_layer_1d(x, w1, w2, use_max_pooling=True))
    ref_max = se_layer_1d_ref(x, w1, w2, use_max_pooling=True)
    assert jnp.allclose(out_max, ref_max, atol=1e-5, rtol=1e-5), "max-pool mismatch vs reference"

    # Partial last batch block with cdiv tiling: bs=3, forced batch tile of 2.
    x3 = jax.random.normal(kx2, (3, s, h), dtype=jnp.float32)
    out3 = jax.block_until_ready(se_layer_1d(x3, w1, w2, batch_tile=2))
    ref3 = se_layer_1d_ref(x3, w1, w2)
    assert jnp.allclose(out3, ref3, atol=1e-5, rtol=1e-5), "partial batch block mismatch"

    # Hidden-axis streaming fallback (forced): h=320 -> h blocks of 128, last partial.
    xh = jax.random.normal(kx3, (bs, s, 320), dtype=jnp.float32)
    out_h = jax.block_until_ready(se_layer_1d(xh, w1, w2, h_block=128))
    ref_h = se_layer_1d_ref(xh, w1, w2)
    assert jnp.allclose(out_h, ref_h, atol=1e-5, rtol=1e-5), "h-stream avg-pool mismatch"
    out_hm = jax.block_until_ready(
        se_layer_1d(xh, w1, w2, h_block=128, use_max_pooling=True))
    ref_hm = se_layer_1d_ref(xh, w1, w2, use_max_pooling=True)
    assert jnp.allclose(out_hm, ref_hm, atol=1e-5, rtol=1e-5), "h-stream max-pool mismatch"

    print("KERNEL_OK")
</pallas_src>

<mosaic_0001>
module attributes {stable_mosaic.version = 11 : i64} {
  func.func @_se_kernel(%arg0: i32, %arg1: memref<1x8x16xf32, #tpu.memory_space<vmem>>, %arg2: memref<8x2xf32, #tpu.memory_space<vmem>>, %arg3: memref<2x8xf32, #tpu.memory_space<vmem>>, %arg4: memref<1x8x16xf32, #tpu.memory_space<vmem>>) attributes {dimension_semantics = [#tpu.dimension_semantics<parallel>], iteration_bounds = array<i64: 2>, scalar_prefetch = 0 : i64, scratch_operands = 0 : i64, tpu.core_type = #tpu.core_type<tc>, window_params = [{transform_indices = @transform_0, window_bounds = array<i64: 1, 8, 16>}, {pipeline_mode = #tpu.pipeline_mode<synchronous>, transform_indices = @transform_1, window_bounds = array<i64: 8, 2>}, {pipeline_mode = #tpu.pipeline_mode<synchronous>, transform_indices = @transform_2, window_bounds = array<i64: 2, 8>}, {transform_indices = @transform_3, window_bounds = array<i64: 1, 8, 16>}]} {
    %c0 = arith.constant 0 : index
    %c0_0 = arith.constant 0 : index
    %c0_1 = arith.constant 0 : index
    %0 = vector.load %arg1[%c0, %c0_0, %c0_1] : memref<1x8x16xf32, #tpu.memory_space<vmem>>, vector<1x8x16xf32>
    %cst = arith.constant dense<0.000000e+00> : vector<1x8xf32>
    %1 = vector.multi_reduction <add>, %0, %cst [2] : vector<1x8x16xf32> to vector<1x8xf32>
    %cst_2 = arith.constant 1.600000e+01 : f32
    %2 = vector.broadcast %cst_2 : f32 to vector<1x8xf32>
    %3 = arith.divf %1, %2 : vector<1x8xf32>
    %c0_3 = arith.constant 0 : index
    %c0_4 = arith.constant 0 : index
    %4 = vector.load %arg2[%c0_3, %c0_4] : memref<8x2xf32, #tpu.memory_space<vmem>>, vector<8x2xf32>
    %cst_5 = arith.constant dense<0.000000e+00> : vector<1x2xf32>
    %5 = tpu.matmul %3, %4, %cst_5 {dimension_numbers = #tpu.dot_dimension_numbers<[1], [0], [0], [1], [0, 0, 1, 1], [], []>} : vector<1x8xf32>, vector<8x2xf32>, vector<1x2xf32> -> vector<1x2xf32>
    %cst_6 = arith.constant 0.000000e+00 : f32
    %6 = vector.broadcast %cst_6 : f32 to vector<1x2xf32>
    %7 = arith.maximumf %5, %6 : vector<1x2xf32>
    %c0_7 = arith.constant 0 : index
    %c0_8 = arith.constant 0 : index
    %8 = vector.load %arg3[%c0_7, %c0_8] : memref<2x8xf32, #tpu.memory_space<vmem>>, vector<2x8xf32>
    %cst_9 = arith.constant dense<0.000000e+00> : vector<1x8xf32>
    %9 = tpu.matmul %7, %8, %cst_9 {dimension_numbers = #tpu.dot_dimension_numbers<[1], [0], [0], [1], [0, 0, 1, 1], [], []>} : vector<1x2xf32>, vector<2x8xf32>, vector<1x8xf32> -> vector<1x8xf32>
    %10 = arith.negf %9 : vector<1x8xf32>
    %11 = math.exp %10 : vector<1x8xf32>
    %cst_10 = arith.constant 1.000000e+00 : f32
    %12 = vector.broadcast %cst_10 : f32 to vector<1x8xf32>
    %13 = arith.addf %12, %11 : vector<1x8xf32>
    %14 = arith.divf %12, %13 : vector<1x8xf32>
    %15 = vector.shape_cast %14 : vector<1x8xf32> to vector<1x8x1xf32>
    %c0_11 = arith.constant 0 : index
    %c0_12 = arith.constant 0 : index
    %c0_13 = arith.constant 0 : index
    %16 = vector.load %arg1[%c0_11, %c0_12, %c0_13] : memref<1x8x16xf32, #tpu.memory_space<vmem>>, vector<1x8x16xf32>
    %17 = vector.broadcast %15 : vector<1x8x1xf32> to vector<1x8x16xf32>
    %18 = arith.mulf %16, %17 : vector<1x8x16xf32>
    %c0_14 = arith.constant 0 : index
    %c0_15 = arith.constant 0 : index
    %c0_16 = arith.constant 0 : index
    %19 = vector.load %arg4[%c0_14, %c0_15, %c0_16] : memref<1x8x16xf32, #tpu.memory_space<vmem>>, vector<1x8x16xf32>
    tpu.vector_store %arg4[%c0_14, %c0_15, %c0_16], %18 {strides = array<i32>} : memref<1x8x16xf32, #tpu.memory_space<vmem>>, vector<1x8x16xf32>,
    return
  }
  func.func @transform_0(%arg0: i32) -> (i32, i32, i32) {
    %c0_i32 = arith.constant 0 : i32
    %c0_i32_0 = arith.constant 0 : i32
    %c0_i32_1 = arith.constant 0 : i32
    return %arg0, %c0_i32, %c0_i32_0 : i32, i32, i32
  }
  func.func @transform_1(%arg0: i32) -> (i32, i32) {
    %c0_i32 = arith.constant 0 : i32
    %c0_i32_0 = arith.constant 0 : i32
    %c0_i32_1 = arith.constant 0 : i32
    return %c0_i32, %c0_i32_0 : i32, i32
  }
  func.func @transform_2(%arg0: i32) -> (i32, i32) {
    %c0_i32 = arith.constant 0 : i32
    %c0_i32_0 = arith.constant 0 : i32
    %c0_i32_1 = arith.constant 0 : i32
    return %c0_i32, %c0_i32_0 : i32, i32
  }
  func.func @transform_3(%arg0: i32) -> (i32, i32, i32) {
    %c0_i32 = arith.constant 0 : i32
    %c0_i32_0 = arith.constant 0 : i32
    %c0_i32_1 = arith.constant 0 : i32
    return %arg0, %c0_i32, %c0_i32_0 : i32, i32, i32
  }
}

</mosaic_0001>

<llo_original>
// kernel: tpu_custom_call.1
$region0: #{tpu_custom_call.1}
  #allocation0 [shape = 'u32[]', space=smem, size = 0x4, offset = 0x4, fixed_abs, tag = 'smem constant byte address 0x4 - core index']
  #allocation1 [shape = 'u32[144,128]{1,0:T(1,128)}', space=vmem, size = 0x12000, scoped, tag = 'internal scratch']
  %s0 = inlined_call_operand.hbm [shape: f32[2,8,16], index: 0, kind: input, shape index: {}]
  %s1 = inlined_call_operand.vmem [shape: f32[8,2], index: 1, kind: input, shape index: {}]
  %s2 = inlined_call_operand.vmem [shape: f32[2,8], index: 2, kind: input, shape index: {}]
  %s3 = inlined_call_operand.hbm [shape: f32[2,8,16], index: 3, kind: output, shape index: {}]
  %s4 = sld [smem:[#allocation0]]
  $region49: #{tpu_custom_call.1} parent=0
    _
  %s6 = ssub.s32 1, %s4
  %s7 = scalar_select 0, %s6, %s4
  $region1: #{tpu_custom_call.1} parent=0
    #allocation2 [shape = 'u8[8192]{0}', space=vmem, size = 0x2000, scoped, tag = 'input window, operand 0']
    #allocation3 [shape = 's32[2]{0}', space=sflag, size = 0x8, scoped, tag = 'scoped memory for tpu_custom_call.1']
    #allocation4 [shape = 's32[2]{0}', space=sflag, size = 0x8, scoped, tag = 'scoped memory for tpu_custom_call.1']
    #allocation5 [shape = 'u8[8192]{0}', space=vmem, size = 0x2000, scoped, tag = 'output window, operand 0']
    %8 = vsyncpa [#allocation3], 0
    %s9 = scalar_lea.sflag [#allocation3], 1
    %10 = vsyncpa %s9, 0
    %11 = vsyncpa [#allocation4], 0
    %s12 = scalar_lea.sflag [#allocation4], 1
    %13 = vsyncpa %s12, 0
    loop: start=0, step=1, limit=4
    $region2: #{tpu_custom_call.1} parent=1 // loop_pre_header
      _
    $region3: #{tpu_custom_call.1} parent=1 // loop_header
      %s15 = sphi 0, %s19
      %p16 = scmp.ge.s32.totalorder %s15, 4
      %s25 = sphi 0, %s27
      %s28 = sphi 0, %s25
      %s29 = sphi 0, %s28
      %s45 = sphi 0, %s29
      %s49 = sphi 0, %s49
      %s51 = sphi 0, %s49
      %s52 = sphi 0, %s51
      %s66 = sphi 0, %s52
      %s70 = sphi 0, %s70
      %s72 = sphi 0, %s70
      %s73 = sphi 0, %s72
      %s87 = sphi 0, %s73
      %s93 = sphi 0, %s95
      %s96 = sphi 0, %s93
      %s97 = sphi 0, %s96
      %s113 = sphi 0, %s97
    $region4: #{tpu_custom_call.1} parent=1 // loop_header_branch
      %18 = sbr.rel (%p16) target = $region8
    $region5: #{tpu_custom_call.1} parent=1 // loop_body
      %s20 = ssub.s32 %s15, 1
      %s21 = ssub.s32 %s15, 2
      %s22 = sadd.s32 %s15, 1
      %s23 = ssub.s32 %s15, %s22
      %p24 = scmp.eq.s32.totalorder %s23, 0
      %s26 = sadd.s32 %s25, 1
      %s27 = scalar_select %p24, %s25, %s26
      %p30 = pneg %p24
      %p31 = scmp.eq.s32.totalorder %s15, 1
      %p32 = por %p30, %p31
      %p33 = scmp.ne.s32.totalorder %s25, %s28
      %p34 = scmp.eq.s32.totalorder %s15, 0
      %p35 = por %p33, %p34
      %p36 = scmp.ne.s32.totalorder %s25, %s28
      %p37 = scmp.eq.s32.totalorder %s20, 1
      %p38 = por %p36, %p37
      %p39 = scmp.ne.s32.totalorder %s28, %s29
      %p40 = scmp.eq.s32.totalorder %s20, 0
      %p41 = por %p39, %p40
      %p42 = scmp.ne.s32.totalorder %s28, %s29
      %p43 = scmp.eq.s32.totalorder %s21, 1
      %p44 = por %p42, %p43
      %p46 = scmp.ne.s32.totalorder %s29, %s45
      %p47 = scmp.eq.s32.totalorder %s21, 0
      %p48 = por %p46, %p47
      %s50 = sadd.s32 %s49, 1
      %p53 = scmp.eq.s32.totalorder %s15, 1
      %p54 = scmp.ne.s32.totalorder %s49, %s51
      %p55 = scmp.eq.s32.totalorder %s15, 0
      %p56 = por %p54, %p55
      %p57 = scmp.ne.s32.totalorder %s49, %s51
      %p58 = scmp.eq.s32.totalorder %s20, 1
      %p59 = por %p57, %p58
      %p60 = scmp.ne.s32.totalorder %s51, %s52
      %p61 = scmp.eq.s32.totalorder %s20, 0
      %p62 = por %p60, %p61
      %p63 = scmp.ne.s32.totalorder %s51, %s52
      %p64 = scmp.eq.s32.totalorder %s21, 1
      %p65 = por %p63, %p64
      %p67 = scmp.ne.s32.totalorder %s52, %s66
      %p68 = scmp.eq.s32.totalorder %s21, 0
      %p69 = por %p67, %p68
      %s71 = sadd.s32 %s70, 1
      %p74 = scmp.eq.s32.totalorder %s15, 1
      %p75 = scmp.ne.s32.totalorder %s70, %s72
      %p76 = scmp.eq.s32.totalorder %s15, 0
      %p77 = por %p75, %p76
      %p78 = scmp.ne.s32.totalorder %s70, %s72
      %p79 = scmp.eq.s32.totalorder %s20, 1
      %p80 = por %p78, %p79
      %p81 = scmp.ne.s32.totalorder %s72, %s73
      %p82 = scmp.eq.s32.totalorder %s20, 0
      %p83 = por %p81, %p82
      %p84 = scmp.ne.s32.totalorder %s72, %s73
      %p85 = scmp.eq.s32.totalorder %s21, 1
      %p86 = por %p84, %p85
      %p88 = scmp.ne.s32.totalorder %s73, %s87
      %p89 = scmp.eq.s32.totalorder %s21, 0
      %p90 = por %p88, %p89
      %s91 = ssub.s32 %s15, %s22
      %p92 = scmp.eq.s32.totalorder %s91, 0
      %s94 = sadd.s32 %s93, 1
      %s95 = scalar_select %p92, %s93, %s94
      %p98 = pneg %p92
      %p99 = scmp.eq.s32.totalorder %s15, 1
      %p100 = por %p98, %p99
      %p101 = scmp.ne.s32.totalorder %s93, %s96
      %p102 = scmp.eq.s32.totalorder %s15, 0
      %p103 = por %p101, %p102
      %p104 = scmp.ne.s32.totalorder %s93, %s96
      %p105 = scmp.eq.s32.totalorder %s20, 1
      %p106 = por %p104, %p105
      %p107 = scmp.ne.s32.totalorder %s96, %s97
      %p108 = scmp.eq.s32.totalorder %s20, 0
      %p109 = por %p107, %p108
      %p110 = scmp.ne.s32.totalorder %s96, %s97
      %p111 = scmp.eq.s32.totalorder %s21, 1
      %p112 = por %p110, %p111
      %p114 = scmp.ne.s32.totalorder %s97, %s113
      %p115 = scmp.eq.s32.totalorder %s21, 0
      %p116 = por %p114, %p115
      %p117 = scmp.le.s32.totalorder 1, %s15
      %p118 = scmp.lt.s32.totalorder %s15, 3
      %p119 = pnand %p117, %p118
      %p120 = pneg %p119
      // Predicated region
      $region9: #{tpu_custom_call.1} parent=5 // pred_check
        _
      $region10: #{tpu_custom_call.1} parent=5 // pred_check_branch
        %122 = sbr.rel (%p119) target = $region12
      $region11: #{tpu_custom_call.1} parent=5 // pred_region
        %s123 = ssub.s32 %s15, 1
        // Predicated region
        $region13: #{tpu_custom_call.1} parent=11 // pred_check
          %p124 = pneg %p62
        $region14: #{tpu_custom_call.1} parent=11 // pred_check_branch
          %126 = sbr.rel (%p124) target = $region16
        $region15: #{tpu_custom_call.1} parent=11 // pred_region
          _
        $region16: #{tpu_custom_call.1} parent=11 // pred_fallthru
          _
        // Predicated region
        $region17: #{tpu_custom_call.1} parent=11 // pred_check
          %p127 = pneg %p83
        $region18: #{tpu_custom_call.1} parent=11 // pred_check_branch
          %129 = sbr.rel (%p127) target = $region20
        $region19: #{tpu_custom_call.1} parent=11 // pred_region
          _
        $region20: #{tpu_custom_call.1} parent=11 // pred_fallthru
          _
      $region12: #{tpu_custom_call.1} parent=5 // pred_fallthru
        _
      %p130 = scmp.lt.s32.totalorder %s15, 2
      // Predicated region
      $region21: #{tpu_custom_call.1} parent=5 // pred_check
        %p131 = pneg %p130
      $region22: #{tpu_custom_call.1} parent=5 // pred_check_branch
        %133 = sbr.rel (%p131) target = $region24
      $region23: #{tpu_custom_call.1} parent=5 // pred_region
        // Predicated region
        $region25: #{tpu_custom_call.1} parent=23 // pred_check
          %p134 = pneg %p35
        $region26: #{tpu_custom_call.1} parent=23 // pred_check_branch
          %136 = sbr.rel (%p134) target = $region28
        $region27: #{tpu_custom_call.1} parent=23 // pred_region
          %s137 = sand.u32 %s25, 1
          %s138 = scalar_lea.sflag [#allocation3], %s137
          %s139 = sand.u32 %s25, 1
          %s140 = smul.addr %s139, 8
          %s141 = scalar_lea.vmem [#allocation2], %s140
          %s143 = ssub.s32 128, 128
          %144 = vsyncadd %s138, %s143
          %s145 = smul.addr %s15, 128
          %s146 = scalar_lea.hbm %s0, %s145
          %s148 = sshll.u32 %s141, 4
          %s149 = int_to_ptr.vmem [resolvable:$true] %s148
          %151 = dma.hbm_to_vmem [thread:$0]  %s146, 128, %s149, %s138
        $region28: #{tpu_custom_call.1} parent=23 // pred_fallthru
          _
      $region24: #{tpu_custom_call.1} parent=5 // pred_fallthru
        _
      %p152 = scmp.le.s32.totalorder 1, %s15
      %p153 = scmp.lt.s32.totalorder %s15, 3
      %p154 = pnand %p152, %p153
      %p155 = pneg %p154
      // Predicated region
      $region29: #{tpu_custom_call.1} parent=5 // pred_check
        _
      $region30: #{tpu_custom_call.1} parent=5 // pred_check_branch
        %157 = sbr.rel (%p154) target = $region32
      $region31: #{tpu_custom_call.1} parent=5 // pred_region
        %s158 = ssub.s32 %s15, 1
        %s159 = sand.u32 %s28, 1
        %s160 = scalar_lea.sflag [#allocation3], %s159
        %s161 = sand.u32 %s28, 1
        %s162 = smul.addr %s161, 8
        %s163 = scalar_lea.vmem [#allocation2], %s162
        // Predicated region
        $region33: #{tpu_custom_call.1} parent=31 // pred_check
          %p164 = pneg %p41
        $region34: #{tpu_custom_call.1} parent=31 // pred_check_branch
          %166 = sbr.rel (%p164) target = $region36
        $region35: #{tpu_custom_call.1} parent=31 // pred_region
          %167 = dma.done %s160, 128
        $region36: #{tpu_custom_call.1} parent=31 // pred_fallthru
          _
        %s168 = sand.u32 %s28, 1
        %s169 = scalar_lea.sflag [#allocation3], %s168
        %s170 = sand.u32 %s28, 1
        %s171 = smul.addr %s170, 8
        %s172 = scalar_lea.vmem [#allocation2], %s171
        %p173 = pneg %p41
        %p174 = pneg %p38
        %p175 = pneg %p62
        %p176 = pneg %p59
        %p177 = pneg %p83
        %p178 = pneg %p80
        %p179 = pneg %p109
        %p180 = pneg %p106
        %s181 = sand.u32 %s96, 1
        %s182 = scalar_lea.sflag [#allocation4], %s181
        %s183 = sand.u32 %s96, 1
        %s184 = smul.addr %s183, 8
        %s185 = scalar_lea.vmem [#allocation5], %s184
        %v186 = vld [vmem:[%s163] sm:$0xff]
        %vm187 = vcmask 130048
        %v188 = vsel %vm187, %v186, 0.0
        %189 = vadd.xlane.f32.xlu0 %v188
        %v190 = vpop.xlane.xlu0 %189
        %v191 = vrcp.pop 16.0
        %v192 = vmul.f32 %v190, %v191
        %v193 = vld [vmem:[%s1] sm:$0xff]
        %v195 = vlaneseq
        %v196 = vand.u32 %v195, 127
        %v197 = vlaneseq
        %v198 = vshrl.u32 %v197, 7
        %v199 = vsub.s32 %v196, %v198
        %v200 = vrot.slane %v192, %v199
        %vm201 = vcmask 64512
        %v202 = vsel %vm201, %v200, 0
        %204 = vmatprep.subr.mxu0 0.0
        %205 = vmatpush1.msra.mxu0 0.0
        %206 = vmatprep.subr.mxu0 0.0
        %207 = vmatpush1.msra.mxu0 0.0
        %208 = vmatprep.subr.mxu0 0.0
        %209 = vmatpush1.msra.mxu0 0.0
        %210 = vmatprep.subr.mxu0 0.0
        %211 = vmatpush1.msra.mxu0 0.0
        %212 = vmatprep.subr.mxu0 0.0
        %213 = vmatpush1.msra.mxu0 0.0
        %214 = vmatprep.subr.mxu0 0.0
        %215 = vmatpush1.msra.mxu0 0.0
        %216 = vmatprep.subr.mxu0 0.0
        %217 = vmatpush1.msra.mxu0 0.0
        %218 = vmatprep.subr.mxu0 0.0
        %219 = vmatpush1.msra.mxu0 0.0
        %220 = vmatprep.subr.mxu0 0.0
        %221 = vmatpush1.msra.mxu0 0.0
        %222 = vmatprep.subr.mxu0 0.0
        %223 = vmatpush1.msra.mxu0 0.0
        %224 = vmatprep.subr.mxu0 0.0
        %225 = vmatpush1.msra.mxu0 0.0
        %226 = vmatprep.subr.mxu0 0.0
        %227 = vmatpush1.msra.mxu0 0.0
        %228 = vmatprep.subr.mxu0 0.0
        %229 = vmatpush1.msra.mxu0 0.0
        %230 = vmatprep.subr.mxu0 0.0
        %231 = vmatpush1.msra.mxu0 0.0
        %232 = vmatprep.subr.mxu0 0.0
        %233 = vmatpush1.msra.mxu0 0.0
        %234 = vmatprep.subr.mxu0 0.0
        %235 = vmatpush1.msra.mxu0 %v193
        %236 = vmatprep.subr.mxu0 0.0
        %237 = vmatpush2.msra.mxu0 0.0
        %238 = vmatprep.subr.mxu0 0.0
        %239 = vmatpush2.msra.mxu0 0.0
        %240 = vmatprep.subr.mxu0 0.0
        %241 = vmatpush2.msra.mxu0 0.0
        %242 = vmatprep.subr.mxu0 0.0
        %243 = vmatpush2.msra.mxu0 0.0
        %244 = vmatprep.subr.mxu0 0.0
        %245 = vmatpush2.msra.mxu0 0.0
        %246 = vmatprep.subr.mxu0 0.0
        %247 = vmatpush2.msra.mxu0 0.0
        %248 = vmatprep.subr.mxu0 0.0
        %249 = vmatpush2.msra.mxu0 0.0
        %250 = vmatprep.subr.mxu0 0.0
        %251 = vmatpush2.msra.mxu0 0.0
        %252 = vmatprep.subr.mxu0 0.0
        %253 = vmatpush2.msra.mxu0 0.0
        %254 = vmatprep.subr.mxu0 0.0
        %255 = vmatpush2.msra.mxu0 0.0
        %256 = vmatprep.subr.mxu0 0.0
        %257 = vmatpush2.msra.mxu0 0.0
        %258 = vmatprep.subr.mxu0 0.0
        %259 = vmatpush2.msra.mxu0 0.0
        %260 = vmatprep.subr.mxu0 0.0
        %261 = vmatpush2.msra.mxu0 0.0
        %262 = vmatprep.subr.mxu0 0.0
        %263 = vmatpush2.msra.mxu0 0.0
        %264 = vmatprep.subr.mxu0 0.0
        %265 = vmatpush2.msra.mxu0 0.0
        %266 = vmatprep.subr.mxu0 0.0
        %267 = vmatpush2.msra.mxu0 0.0
        %268 = vmatprep.mubr.f32.mxu0 0.0
        %269 = vmatmul.mubr.f32.gmra.mxu0 %v202
        %v270 = vpop.f32.mrf.mxu0
        %v271 = vadd.f32 0.0, %v270
        %v272 = vpop.f32.mrf.mxu0
        %273 = vdwg.mxu0
        %v274 = vmax.f32 %v271, 0.0
        %v275 = vld [vmem:[%s2] sm:$0x3]
        %vm276 = vcmask 15360
        %v278 = vsel %vm276, %v274, 0
        %vm280 = vcmask 1041408
        %v282 = vsel %vm280, %v275, 0
        %284 = vmatprep.subr.mxu0 0.0
        %285 = vmatpush1.msra.mxu0 0.0
        %286 = vmatprep.subr.mxu0 0.0
        %287 = vmatpush1.msra.mxu0 0.0
        %288 = vmatprep.subr.mxu0 0.0
        %289 = vmatpush1.msra.mxu0 0.0
        %290 = vmatprep.subr.mxu0 0.0
        %291 = vmatpush1.msra.mxu0 0.0
        %292 = vmatprep.subr.mxu0 0.0
        %293 = vmatpush1.msra.mxu0 0.0
        %294 = vmatprep.subr.mxu0 0.0
        %295 = vmatpush1.msra.mxu0 0.0
        %296 = vmatprep.subr.mxu0 0.0
        %297 = vmatpush1.msra.mxu0 0.0
        %298 = vmatprep.subr.mxu0 0.0
        %299 = vmatpush1.msra.mxu0 0.0
        %300 = vmatprep.subr.mxu0 0.0
        %301 = vmatpush1.msra.mxu0 0.0
        %302 = vmatprep.subr.mxu0 0.0
        %303 = vmatpush1.msra.mxu0 0.0
        %304 = vmatprep.subr.mxu0 0.0
        %305 = vmatpush1.msra.mxu0 0.0
        %306 = vmatprep.subr.mxu0 0.0
        %307 = vmatpush1.msra.mxu0 0.0
        %308 = vmatprep.subr.mxu0 0.0
        %309 = vmatpush1.msra.mxu0 0.0
        %310 = vmatprep.subr.mxu0 0.0
        %311 = vmatpush1.msra.mxu0 0.0
        %312 = vmatprep.subr.mxu0 0.0
        %313 = vmatpush1.msra.mxu0 0.0
        %314 = vmatprep.subr.mxu0 0.0
        %315 = vmatpush1.msra.mxu0 %v282
        %316 = vmatprep.subr.mxu0 0.0
        %317 = vmatpush2.msra.mxu0 0.0
        %318 = vmatprep.subr.mxu0 0.0
        %319 = vmatpush2.msra.mxu0 0.0
        %320 = vmatprep.subr.mxu0 0.0
        %321 = vmatpush2.msra.mxu0 0.0
        %322 = vmatprep.subr.mxu0 0.0
        %323 = vmatpush2.msra.mxu0 0.0
        %324 = vmatprep.subr.mxu0 0.0
        %325 = vmatpush2.msra.mxu0 0.0
        %326 = vmatprep.subr.mxu0 0.0
        %327 = vmatpush2.msra.mxu0 0.0
        %328 = vmatprep.subr.mxu0 0.0
        %329 = vmatpush2.msra.mxu0 0.0
        %330 = vmatprep.subr.mxu0 0.0
        %331 = vmatpush2.msra.mxu0 0.0
        %332 = vmatprep.subr.mxu0 0.0
        %333 = vmatpush2.msra.mxu0 0.0
        %334 = vmatprep.subr.mxu0 0.0
        %335 = vmatpush2.msra.mxu0 0.0
        %336 = vmatprep.subr.mxu0 0.0
        %337 = vmatpush2.msra.mxu0 0.0
        %338 = vmatprep.subr.mxu0 0.0
        %339 = vmatpush2.msra.mxu0 0.0
        %340 = vmatprep.subr.mxu0 0.0
        %341 = vmatpush2.msra.mxu0 0.0
        %342 = vmatprep.subr.mxu0 0.0
        %343 = vmatpush2.msra.mxu0 0.0
        %344 = vmatprep.subr.mxu0 0.0
        %345 = vmatpush2.msra.mxu0 0.0
        %346 = vmatprep.subr.mxu0 0.0
        %347 = vmatpush2.msra.mxu0 0.0
        %348 = vmatprep.mubr.f32.mxu0 0.0
        %349 = vmatmul.mubr.f32.gmra.mxu0 %v278
        %v350 = vpop.f32.mrf.mxu0
        %v351 = vadd.f32 0.0, %v350
        %v352 = vpop.f32.mrf.mxu0
        %353 = vdwg.mxu0
        %v354 = vxor.u32 %v351, 2147483648
        %v355 = vmul.f32 %v354, 1.442695
        %v356 = vpow.pop %v355
        %v357 = vadd.f32 %v356, 1.0
        %v358 = vrcp.pop %v357
        %v359 = vmul.f32 1.0, %v358
        %v360 = vlaneseq
        %v361 = vshrl.u32 %v360, 7
        %v362 = vsub.s32 0, %v361
        %v363 = vrot.slane %v359, %v362
        %365 = vbcast.lane.b32.xlu0 %v363, 256
        %v366 = vpop.permute.xlu0 %365
        %v367 = vmul.f32 %v186, %v366
        %368 = vst.msk [vmem:[%s185] sm:$0xff] %vm187, %v367
        %s369 = sand.u32 %s96, 1
        %s370 = scalar_lea.sflag [#allocation4], %s369
        %s371 = sand.u32 %s96, 1
        %s372 = smul.addr %s371, 8
        %s373 = scalar_lea.vmem [#allocation5], %s372
        // Predicated region
        $region37: #{tpu_custom_call.1} parent=31 // pred_check
          %p374 = pneg %p106
        $region38: #{tpu_custom_call.1} parent=31 // pred_check_branch
          %376 = sbr.rel (%p374) target = $region40
        $region39: #{tpu_custom_call.1} parent=31 // pred_region
          %s378 = ssub.s32 128, 128
          %379 = vsyncadd %s370, %s378
          %s380 = smul.addr %s20, 128
          %s381 = scalar_lea.hbm %s3, %s380
          %s383 = sshll.u32 %s373, 4
          %s384 = int_to_ptr.vmem [resolvable:$true] %s383
          %386 = dma.vmem_to_hbm [thread:$0]  %s384, 128, %s381, %s370
        $region40: #{tpu_custom_call.1} parent=31 // pred_fallthru
          _
      $region32: #{tpu_custom_call.1} parent=5 // pred_fallthru
        _
      %p387 = scmp.le.s32.totalorder 2, %s15
      // Predicated region
      $region41: #{tpu_custom_call.1} parent=5 // pred_check
        %p388 = pneg %p387
      $region42: #{tpu_custom_call.1} parent=5 // pred_check_branch
        %390 = sbr.rel (%p388) target = $region44
      $region43: #{tpu_custom_call.1} parent=5 // pred_region
        %s391 = ssub.s32 %s15, 2
        // Predicated region
        $region45: #{tpu_custom_call.1} parent=43 // pred_check
          %p392 = pneg %p112
        $region46: #{tpu_custom_call.1} parent=43 // pred_check_branch
          %394 = sbr.rel (%p392) target = $region48
        $region47: #{tpu_custom_call.1} parent=43 // pred_region
          %s395 = sand.u32 %s97, 1
          %s396 = scalar_lea.sflag [#allocation4], %s395
          %s397 = sand.u32 %s97, 1
          %s398 = smul.addr %s397, 8
          %s399 = scalar_lea.vmem [#allocation5], %s398
          %400 = dma.done %s396, 128
        $region48: #{tpu_custom_call.1} parent=43 // pred_fallthru
          _
      $region44: #{tpu_custom_call.1} parent=5 // pred_fallthru
        _
    $region6: #{tpu_custom_call.1} parent=1 // loop_footer
      %s19 = sadd.s32 1, %s15
    $region7: #{tpu_custom_call.1} parent=1 // loop_footer_branch
      %14 = sbr.rel target = $region3
    $region8: #{tpu_custom_call.1} parent=1 // loop_exit
      _
    %401 = vsyncpa [#allocation3], 1
    %s402 = scalar_lea.sflag [#allocation3], 1
    %403 = vsyncpa %s402, 1
    %404 = vsyncpa [#allocation4], 1
    %s405 = scalar_lea.sflag [#allocation4], 1
    %406 = vsyncpa %s405, 1

</llo_original>
